<compile_context>
chip_gen: v5e
topology: v5e:2x2
jax: 0.10.0
libtpu: 0.0.40
codegen_flags: <defaults>
</compile_context>

<pallas_src>
import jax
import jax.numpy as jnp
from jax import lax
from jax.experimental import pallas as pl
from jax.experimental.pallas import tpu as pltpu


def _pick_row_tile(R, L, C, itemsize, target_bytes):
    """Rows (of the internal (R, L) spatial layout) processed per grid step.

    Must be a multiple of 8 (f32 sublane tile) or equal to R.  Prefers the
    largest multiple of 8 that also divides R (kills the per-step ragged
    mask), falling back to the masked ragged path only when no divisor lies
    within half of the byte budget.
    """
    if R <= 8:
        return R
    bytes_per_row = max(1, C * L * itemsize)
    max_tr = max(1, target_bytes // bytes_per_row)
    if max_tr >= R:
        return R
    max_tr8 = max(8, (max_tr // 8) * 8)
    tr = max_tr8
    while tr >= max(8, max_tr8 // 2):
        if R % tr == 0:
            return tr          # divisor of R: no ragged masking needed
        tr -= 8
    return max_tr8             # ragged tail, masked in-kernel


def _make_kernel(NB, C, TR, L, R, ragged):
    Cm = C - 1
    sub_groups = TR // 8 if (TR % 8 == 0) else None

    def collapse(v):
        # (NB, Cm, TR, L) -> (Cm, acc_s, L) using only elementwise vreg adds
        # in the steady state; the cross-lane/sublane XLU reduce is deferred
        # to the epilogue.
        v = jnp.sum(v, axis=0)                                   # fold batch
        if sub_groups is not None:
            return jnp.sum(v.reshape(Cm, sub_groups, 8, L), axis=1)
        return jnp.sum(v, axis=1, keepdims=True)

    def kernel(x_ref, t_ref, inter_ref, sin_ref, st_ref,
               inter_acc, sin_acc, st_acc):
        k = pl.program_id(1)

        @pl.when(k == 0)
        def _():
            inter_acc[...] = jnp.zeros_like(inter_acc)
            sin_acc[...] = jnp.zeros_like(sin_acc)
            st_acc[...] = jnp.zeros_like(st_acc)

        # Classes 1..C-1 only: class 0 is discarded by the loss, so never
        # load / exp it (static major-dim slice of the VMEM block).
        x = x_ref[:, 1:, :, :].astype(jnp.float32)          # (NB, Cm, TR, L)
        t = t_ref[...]                                      # (NB, TR, L)
        cls = lax.broadcasted_iota(jnp.int32, (NB, Cm, TR, L), 1) + 1
        onehot = t[:, None, :, :] == cls                    # bool

        ex = jnp.exp(x)                                     # EUP

        if ragged:
            # Last row-tile overruns R: mask the out-of-range rows.
            row = k * TR + lax.broadcasted_iota(jnp.int32, (TR, L), 0)
            valid = (row < R)[None, None, :, :]
            ex = jnp.where(valid, ex, 0.0)
            onehot = jnp.logical_and(onehot, valid)

        one = jnp.float32(1.0)
        zero = jnp.float32(0.0)
        inter_acc[...] += collapse(jnp.where(onehot, ex, zero))
        sin_acc[...] += collapse(ex)
        st_acc[...] += collapse(jnp.where(onehot, one, zero))

        @pl.when(k == pl.num_programs(1) - 1)
        def _():
            # Single cross-sublane + cross-lane reduction per class, once.
            inter_ref[...] = jnp.sum(jnp.sum(inter_acc[...], axis=1),
                                     axis=1, keepdims=True)
            sin_ref[...] = jnp.sum(jnp.sum(sin_acc[...], axis=1),
                                   axis=1, keepdims=True)
            st_ref[...] = jnp.sum(jnp.sum(st_acc[...], axis=1),
                                  axis=1, keepdims=True)

    return kernel


def el_dice_loss(logits, target, class_num=4, gamma=0.5,
                 row_tile=None, tile_budget_bytes=8 * 1024 * 1024):
    """Matches EL_DiceLoss.forward.

    logits: (N, C, H, W) float (module applies exp(), i.e. expects log-probs)
    target: (N, H, W) integer class labels
    returns: (1,) float32 (torch returns a shape-[1] tensor)
    """
    N, C, H, W = logits.shape
    assert C == class_num and class_num >= 2
    if target.dtype != jnp.int32:
        # Note: for very HBM-bound chips (v5e) a narrow label dtype could be
        # streamed directly; int32 keeps the tiling rules simple here.
        target = target.astype(jnp.int32)

    # Lane-dense spatial layout: fold (H, W) into (R, 128) when that reshape
    # is metadata-only; otherwise keep (H, W) (correct, lanes underfilled).
    P = H * W
    if W % 128 == 0:
        R, L = H, W
    elif P % 128 == 0:
        R, L = P // 128, 128
    else:
        R, L = H, W
    logits = logits.reshape(N, C, R, L)
    target = target.reshape(N, R, L)

    itemsize = jnp.dtype(logits.dtype).itemsize
    if row_tile is None:
        TR = _pick_row_tile(R, L, C, itemsize, tile_budget_bytes)
    else:
        TR = row_tile
        assert TR == R or TR % 8 == 0, "row_tile must be R or a multiple of 8"
    ragged = (R % TR) != 0
    num_k = pl.cdiv(R, TR)
    acc_s = 8 if TR % 8 == 0 else 1
    Cm = C - 1

    # Small-image amortization: block several batch images per grid step so
    # each step still moves ~tile_budget_bytes.  NB always divides N.
    # TODO(synk): on v7x with N==1 (or num_nb==1) one TensorCore idles; a
    # CORE_PARALLEL split of the row range would recover it.
    NB = 1
    if TR == R:
        per_image = max(1, C * R * L * itemsize)
        nb_cap = max(1, tile_budget_bytes // per_image)
        for d in range(min(N, nb_cap), 0, -1):
            if N % d == 0:
                NB = d
                break
    num_nb = N // NB

    kernel = _make_kernel(NB, C, TR, L, R, ragged)

    # VMEM budget: double-buffered logits + target tiles, plus accumulators.
    in_tile = NB * C * TR * L * itemsize
    t_tile = NB * TR * L * 4
    acc_bytes = 3 * Cm * acc_s * L * 4
    need = 2 * (in_tile + t_tile) + acc_bytes
    vmem_limit = int(min(max(need + (8 << 20), 16 << 20), 48 << 20))

    out_sd = jax.ShapeDtypeStruct((num_nb, Cm, 1), jnp.float32)
    inter_nb, sin_nb, st_nb = pl.pallas_call(
        kernel,
        out_shape=(out_sd, out_sd, out_sd),
        grid_spec=pltpu.PrefetchScalarGridSpec(
            num_scalar_prefetch=0,
            grid=(num_nb, num_k),
            in_specs=[
                # (NB, C, TR, L) slab straight out of NCHW.
                pl.BlockSpec((NB, C, TR, L), lambda nb, k: (nb, 0, k, 0)),
                # (NB, TR, L) label tile.
                pl.BlockSpec((NB, TR, L), lambda nb, k: (nb, k, 0)),
            ],
            out_specs=(
                pl.BlockSpec((None, Cm, 1), lambda nb, k: (nb, 0, 0)),
                pl.BlockSpec((None, Cm, 1), lambda nb, k: (nb, 0, 0)),
                pl.BlockSpec((None, Cm, 1), lambda nb, k: (nb, 0, 0)),
            ),
            scratch_shapes=[
                pltpu.VMEM((Cm, acc_s, L), jnp.float32),
                pltpu.VMEM((Cm, acc_s, L), jnp.float32),
                pltpu.VMEM((Cm, acc_s, L), jnp.float32),
            ],
        ),
        compiler_params=pltpu.CompilerParams(
            dimension_semantics=("parallel", "arbitrary"),
            vmem_limit_bytes=vmem_limit),
    )(logits, target)

    # Combine the per-batch-block partial sums (tiny (num_nb, Cm) arrays).
    inter = jnp.sum(inter_nb[:, :, 0], axis=0)
    s_in = jnp.sum(sin_nb[:, :, 0], axis=0)
    s_t = jnp.sum(st_nb[:, :, 0], axis=0)

    # Finalization over class_num-1 scalars (mirrors the torch loop).
    smooth = 0.0  # forward() unconditionally sets self.smooth = 0.0
    union = s_in + s_t
    denom = jnp.where(s_t == 0.0, 1.0, union + smooth)      # safe divide
    dice = jnp.where(s_t == 0.0, 1.0, (2.0 * inter + smooth) / denom)
    # Note: if logits are not log-probabilities dice can exceed 1 and
    # (-log(dice))**gamma is NaN — identical behavior to the PyTorch module.
    Dice = jnp.sum((-jnp.log(dice)) ** gamma)
    return (Dice / (class_num - 1)).reshape(1)


def _el_dice_loss_ref(logits, target, class_num=4, gamma=0.5):
    """Pure-JAX reference transliteration of the PyTorch forward."""
    ex = jnp.exp(logits.astype(jnp.float32))
    total = jnp.zeros((1,), jnp.float32)
    for i in range(1, class_num):
        input_i = ex[:, i, :, :]
        target_i = (target == i).astype(jnp.float32)
        intersect = jnp.sum(input_i * target_i)
        union = jnp.sum(input_i) + jnp.sum(target_i)
        dice = jnp.where(jnp.sum(target_i) == 0, 1.0, (2 * intersect) / union)
        total = total + (-jnp.log(dice)) ** gamma
    return total / (class_num - 1)


if __name__ == "__main__":
    key = jax.random.PRNGKey(0)
    k1, k2, k3, k4, k5, k6 = jax.random.split(key, 6)

    # Config 1: lane-dense flattened path (H*W % 128 == 0), NB batching.
    N, C, H, W = 2, 4, 16, 16
    logits = jax.random.normal(k1, (N, C, H, W), dtype=jnp.float32)
    target = jax.random.randint(k2, (N, H, W), 0, C, dtype=jnp.int32)
    out = jax.block_until_ready(el_dice_loss(logits, target, class_num=C))
    ref = jax.block_until_ready(_el_dice_loss_ref(logits, target, class_num=C))
    assert out.shape == (1,)
    assert jnp.allclose(out, ref, rtol=1e-5, atol=1e-5), (out, ref)

    # Config 2: ragged rows with a forced small row tile — exercises the
    # multi-step accumulation and in-kernel tail masking paths (fallback
    # (H, W) layout since H*W % 128 != 0).
    H2, W2 = 20, 16
    logits2 = jax.random.normal(k3, (N, C, H2, W2), dtype=jnp.float32)
    target2 = jax.random.randint(k4, (N, H2, W2), 0, C, dtype=jnp.int32)
    out2 = jax.block_until_ready(
        el_dice_loss(logits2, target2, class_num=C, row_tile=8))
    ref2 = jax.block_until_ready(
        _el_dice_loss_ref(logits2, target2, class_num=C))
    assert jnp.allclose(out2, ref2, rtol=1e-5, atol=1e-5), (out2, ref2)

    # Config 3: odd batch, flattened path, whole-image tiles with NB=3.
    N3, H3, W3 = 3, 32, 32
    logits3 = jax.random.normal(k5, (N3, C, H3, W3), dtype=jnp.float32)
    target3 = jax.random.randint(k6, (N3, H3, W3), 0, C, dtype=jnp.int32)
    out3 = jax.block_until_ready(el_dice_loss(logits3, target3, class_num=C))
    ref3 = jax.block_until_ready(
        _el_dice_loss_ref(logits3, target3, class_num=C))
    assert jnp.allclose(out3, ref3, rtol=1e-5, atol=1e-5), (out3, ref3)

    print("KERNEL_OK")
</pallas_src>

<mosaic_0001>
module attributes {stable_mosaic.version = 11 : i64} {
  func.func @kernel(%arg0: i32, %arg1: i32, %arg2: memref<2x4x2x128xf32, #tpu.memory_space<vmem>>, %arg3: memref<2x2x128xi32, #tpu.memory_space<vmem>>, %arg4: memref<1x3x1xf32, #tpu.memory_space<vmem>>, %arg5: memref<1x3x1xf32, #tpu.memory_space<vmem>>, %arg6: memref<1x3x1xf32, #tpu.memory_space<vmem>>, %arg7: memref<3x1x128xf32, #tpu.memory_space<vmem>>, %arg8: memref<3x1x128xf32, #tpu.memory_space<vmem>>, %arg9: memref<3x1x128xf32, #tpu.memory_space<vmem>>) attributes {dimension_semantics = [#tpu.dimension_semantics<parallel>, #tpu.dimension_semantics<arbitrary>], iteration_bounds = array<i64: 1, 1>, scalar_prefetch = 0 : i64, scratch_operands = 3 : i64, tpu.core_type = #tpu.core_type<tc>, window_params = [{transform_indices = @transform_0, window_bounds = array<i64: 2, 4, 2, 128>}, {transform_indices = @transform_1, window_bounds = array<i64: 2, 2, 128>}, {transform_indices = @transform_2, window_bounds = array<i64: 1, 3, 1>}, {transform_indices = @transform_3, window_bounds = array<i64: 1, 3, 1>}, {transform_indices = @transform_4, window_bounds = array<i64: 1, 3, 1>}]} {
    %c0_i32 = arith.constant 0 : i32
    %0 = arith.cmpi eq, %arg1, %c0_i32 : i32
    %1 = arith.extui %0 : i1 to i32
    %c0_i32_0 = arith.constant 0 : i32
    %2 = arith.cmpi ne, %1, %c0_i32_0 : i32
    scf.if %2 {
      %cst_34 = arith.constant 0.000000e+00 : f32
      %38 = vector.broadcast %cst_34 : f32 to vector<3x1x128xf32>
      %c0_35 = arith.constant 0 : index
      %c0_36 = arith.constant 0 : index
      %c0_37 = arith.constant 0 : index
      %39 = vector.load %arg7[%c0_35, %c0_36, %c0_37] : memref<3x1x128xf32, #tpu.memory_space<vmem>>, vector<3x1x128xf32>
      tpu.vector_store %arg7[%c0_35, %c0_36, %c0_37], %38 {strides = array<i32>} : memref<3x1x128xf32, #tpu.memory_space<vmem>>, vector<3x1x128xf32>,
      %cst_38 = arith.constant 0.000000e+00 : f32
      %40 = vector.broadcast %cst_38 : f32 to vector<3x1x128xf32>
      %c0_39 = arith.constant 0 : index
      %c0_40 = arith.constant 0 : index
      %c0_41 = arith.constant 0 : index
      %41 = vector.load %arg8[%c0_39, %c0_40, %c0_41] : memref<3x1x128xf32, #tpu.memory_space<vmem>>, vector<3x1x128xf32>
      tpu.vector_store %arg8[%c0_39, %c0_40, %c0_41], %40 {strides = array<i32>} : memref<3x1x128xf32, #tpu.memory_space<vmem>>, vector<3x1x128xf32>,
      %cst_42 = arith.constant 0.000000e+00 : f32
      %42 = vector.broadcast %cst_42 : f32 to vector<3x1x128xf32>
      %c0_43 = arith.constant 0 : index
      %c0_44 = arith.constant 0 : index
      %c0_45 = arith.constant 0 : index
      %43 = vector.load %arg9[%c0_43, %c0_44, %c0_45] : memref<3x1x128xf32, #tpu.memory_space<vmem>>, vector<3x1x128xf32>
      tpu.vector_store %arg9[%c0_43, %c0_44, %c0_45], %42 {strides = array<i32>} : memref<3x1x128xf32, #tpu.memory_space<vmem>>, vector<3x1x128xf32>,
    } else {
    }
    %c0 = arith.constant 0 : index
    %c1 = arith.constant 1 : index
    %c0_1 = arith.constant 0 : index
    %c0_2 = arith.constant 0 : index
    %3 = vector.load %arg2[%c0, %c1, %c0_1, %c0_2] : memref<2x4x2x128xf32, #tpu.memory_space<vmem>>, vector<2x3x2x128xf32>
    %c0_3 = arith.constant 0 : index
    %c0_4 = arith.constant 0 : index
    %c0_5 = arith.constant 0 : index
    %4 = vector.load %arg3[%c0_3, %c0_4, %c0_5] : memref<2x2x128xi32, #tpu.memory_space<vmem>>, vector<2x2x128xi32>
    %5 = tpu.iota {dimensions = array<i32: 1>} : vector<2x3x2x128xi32>
    %c1_i32 = arith.constant 1 : i32
    %6 = vector.broadcast %c1_i32 : i32 to vector<2x3x2x128xi32>
    %7 = arith.addi %5, %6 : vector<2x3x2x128xi32>
    %8 = vector.shape_cast %4 : vector<2x2x128xi32> to vector<2x1x2x128xi32>
    %9 = vector.broadcast %8 : vector<2x1x2x128xi32> to vector<2x3x2x128xi32>
    %10 = arith.cmpi eq, %9, %7 : vector<2x3x2x128xi32>
    %11 = math.exp %3 : vector<2x3x2x128xf32>
    %c0_6 = arith.constant 0 : index
    %c0_7 = arith.constant 0 : index
    %c0_8 = arith.constant 0 : index
    %12 = vector.load %arg7[%c0_6, %c0_7, %c0_8] : memref<3x1x128xf32, #tpu.memory_space<vmem>>, vector<3x1x128xf32>
    %cst = arith.constant 0.000000e+00 : f32
    %13 = vector.broadcast %cst : f32 to vector<2x3x2x128xf32>
    %14 = arith.select %10, %11, %13 : vector<2x3x2x128xi1>, vector<2x3x2x128xf32>
    %cst_9 = arith.constant dense<0.000000e+00> : vector<3x2x128xf32>
    %15 = vector.multi_reduction <add>, %14, %cst_9 [0] : vector<2x3x2x128xf32> to vector<3x2x128xf32>
    %cst_10 = arith.constant dense<0.000000e+00> : vector<3x128xf32>
    %16 = vector.multi_reduction <add>, %15, %cst_10 [1] : vector<3x2x128xf32> to vector<3x128xf32>
    %17 = vector.shape_cast %16 : vector<3x128xf32> to vector<3x1x128xf32>
    %18 = arith.addf %12, %17 : vector<3x1x128xf32>
    %c0_11 = arith.constant 0 : index
    %c0_12 = arith.constant 0 : index
    %c0_13 = arith.constant 0 : index
    %19 = vector.load %arg7[%c0_11, %c0_12, %c0_13] : memref<3x1x128xf32, #tpu.memory_space<vmem>>, vector<3x1x128xf32>
    tpu.vector_store %arg7[%c0_11, %c0_12, %c0_13], %18 {strides = array<i32>} : memref<3x1x128xf32, #tpu.memory_space<vmem>>, vector<3x1x128xf32>,
    %c0_14 = arith.constant 0 : index
    %c0_15 = arith.constant 0 : index
    %c0_16 = arith.constant 0 : index
    %20 = vector.load %arg8[%c0_14, %c0_15, %c0_16] : memref<3x1x128xf32, #tpu.memory_space<vmem>>, vector<3x1x128xf32>
    %cst_17 = arith.constant dense<0.000000e+00> : vector<3x2x128xf32>
    %21 = vector.multi_reduction <add>, %11, %cst_17 [0] : vector<2x3x2x128xf32> to vector<3x2x128xf32>
    %cst_18 = arith.constant dense<0.000000e+00> : vector<3x128xf32>
    %22 = vector.multi_reduction <add>, %21, %cst_18 [1] : vector<3x2x128xf32> to vector<3x128xf32>
    %23 = vector.shape_cast %22 : vector<3x128xf32> to vector<3x1x128xf32>
    %24 = arith.addf %20, %23 : vector<3x1x128xf32>
    %c0_19 = arith.constant 0 : index
    %c0_20 = arith.constant 0 : index
    %c0_21 = arith.constant 0 : index
    %25 = vector.load %arg8[%c0_19, %c0_20, %c0_21] : memref<3x1x128xf32, #tpu.memory_space<vmem>>, vector<3x1x128xf32>
    tpu.vector_store %arg8[%c0_19, %c0_20, %c0_21], %24 {strides = array<i32>} : memref<3x1x128xf32, #tpu.memory_space<vmem>>, vector<3x1x128xf32>,
    %c0_22 = arith.constant 0 : index
    %c0_23 = arith.constant 0 : index
    %c0_24 = arith.constant 0 : index
    %26 = vector.load %arg9[%c0_22, %c0_23, %c0_24] : memref<3x1x128xf32, #tpu.memory_space<vmem>>, vector<3x1x128xf32>
    %cst_25 = arith.constant 1.000000e+00 : f32
    %cst_26 = arith.constant 0.000000e+00 : f32
    %27 = vector.broadcast %cst_25 : f32 to vector<2x3x2x128xf32>
    %28 = vector.broadcast %cst_26 : f32 to vector<2x3x2x128xf32>
    %29 = arith.select %10, %27, %28 : vector<2x3x2x128xi1>, vector<2x3x2x128xf32>
    %cst_27 = arith.constant dense<0.000000e+00> : vector<3x2x128xf32>
    %30 = vector.multi_reduction <add>, %29, %cst_27 [0] : vector<2x3x2x128xf32> to vector<3x2x128xf32>
    %cst_28 = arith.constant dense<0.000000e+00> : vector<3x128xf32>
    %31 = vector.multi_reduction <add>, %30, %cst_28 [1] : vector<3x2x128xf32> to vector<3x128xf32>
    %32 = vector.shape_cast %31 : vector<3x128xf32> to vector<3x1x128xf32>
    %33 = arith.addf %26, %32 : vector<3x1x128xf32>
    %c0_29 = arith.constant 0 : index
    %c0_30 = arith.constant 0 : index
    %c0_31 = arith.constant 0 : index
    %34 = vector.load %arg9[%c0_29, %c0_30, %c0_31] : memref<3x1x128xf32, #tpu.memory_space<vmem>>, vector<3x1x128xf32>
    tpu.vector_store %arg9[%c0_29, %c0_30, %c0_31], %33 {strides = array<i32>} : memref<3x1x128xf32, #tpu.memory_space<vmem>>, vector<3x1x128xf32>,
    %c0_i32_32 = arith.constant 0 : i32
    %35 = arith.cmpi eq, %arg1, %c0_i32_32 : i32
    %36 = arith.extui %35 : i1 to i32
    %c0_i32_33 = arith.constant 0 : i32
    %37 = arith.cmpi ne, %36, %c0_i32_33 : i32
    scf.if %37 {
      %c0_34 = arith.constant 0 : index
      %c0_35 = arith.constant 0 : index
      %c0_36 = arith.constant 0 : index
      %38 = vector.load %arg7[%c0_34, %c0_35, %c0_36] : memref<3x1x128xf32, #tpu.memory_space<vmem>>, vector<3x1x128xf32>
      %cst_37 = arith.constant dense<0.000000e+00> : vector<3x128xf32>
      %39 = vector.multi_reduction <add>, %38, %cst_37 [1] : vector<3x1x128xf32> to vector<3x128xf32>
      %cst_38 = arith.constant dense<0.000000e+00> : vector<3xf32>
      %40 = vector.multi_reduction <add>, %39, %cst_38 [1] : vector<3x128xf32> to vector<3xf32>
      %41 = vector.shape_cast %40 : vector<3xf32> to vector<3x1xf32>
      %c0_39 = arith.constant 0 : index
      %c0_40 = arith.constant 0 : index
      %c0_41 = arith.constant 0 : index
      %42 = vector.load %arg4[%c0_39, %c0_40, %c0_41] : memref<1x3x1xf32, #tpu.memory_space<vmem>>, vector<1x3x1xf32>
      %43 = vector.shape_cast %42 : vector<1x3x1xf32> to vector<3x1xf32>
      %44 = vector.shape_cast %41 : vector<3x1xf32> to vector<1x3x1xf32>
      tpu.vector_store %arg4[%c0_39, %c0_40, %c0_41], %44 {strides = array<i32>} : memref<1x3x1xf32, #tpu.memory_space<vmem>>, vector<1x3x1xf32>,
      %c0_42 = arith.constant 0 : index
      %c0_43 = arith.constant 0 : index
      %c0_44 = arith.constant 0 : index
      %45 = vector.load %arg8[%c0_42, %c0_43, %c0_44] : memref<3x1x128xf32, #tpu.memory_space<vmem>>, vector<3x1x128xf32>
      %cst_45 = arith.constant dense<0.000000e+00> : vector<3x128xf32>
      %46 = vector.multi_reduction <add>, %45, %cst_45 [1] : vector<3x1x128xf32> to vector<3x128xf32>
      %cst_46 = arith.constant dense<0.000000e+00> : vector<3xf32>
      %47 = vector.multi_reduction <add>, %46, %cst_46 [1] : vector<3x128xf32> to vector<3xf32>
      %48 = vector.shape_cast %47 : vector<3xf32> to vector<3x1xf32>
      %c0_47 = arith.constant 0 : index
      %c0_48 = arith.constant 0 : index
      %c0_49 = arith.constant 0 : index
      %49 = vector.load %arg5[%c0_47, %c0_48, %c0_49] : memref<1x3x1xf32, #tpu.memory_space<vmem>>, vector<1x3x1xf32>
      %50 = vector.shape_cast %49 : vector<1x3x1xf32> to vector<3x1xf32>
      %51 = vector.shape_cast %48 : vector<3x1xf32> to vector<1x3x1xf32>
      tpu.vector_store %arg5[%c0_47, %c0_48, %c0_49], %51 {strides = array<i32>} : memref<1x3x1xf32, #tpu.memory_space<vmem>>, vector<1x3x1xf32>,
      %c0_50 = arith.constant 0 : index
      %c0_51 = arith.constant 0 : index
      %c0_52 = arith.constant 0 : index
      %52 = vector.load %arg9[%c0_50, %c0_51, %c0_52] : memref<3x1x128xf32, #tpu.memory_space<vmem>>, vector<3x1x128xf32>
      %cst_53 = arith.constant dense<0.000000e+00> : vector<3x128xf32>
      %53 = vector.multi_reduction <add>, %52, %cst_53 [1] : vector<3x1x128xf32> to vector<3x128xf32>
      %cst_54 = arith.constant dense<0.000000e+00> : vector<3xf32>
      %54 = vector.multi_reduction <add>, %53, %cst_54 [1] : vector<3x128xf32> to vector<3xf32>
      %55 = vector.shape_cast %54 : vector<3xf32> to vector<3x1xf32>
      %c0_55 = arith.constant 0 : index
      %c0_56 = arith.constant 0 : index
      %c0_57 = arith.constant 0 : index
      %56 = vector.load %arg6[%c0_55, %c0_56, %c0_57] : memref<1x3x1xf32, #tpu.memory_space<vmem>>, vector<1x3x1xf32>
      %57 = vector.shape_cast %56 : vector<1x3x1xf32> to vector<3x1xf32>
      %58 = vector.shape_cast %55 : vector<3x1xf32> to vector<1x3x1xf32>
      tpu.vector_store %arg6[%c0_55, %c0_56, %c0_57], %58 {strides = array<i32>} : memref<1x3x1xf32, #tpu.memory_space<vmem>>, vector<1x3x1xf32>,
    } else {
    }
    return
  }
  func.func @transform_0(%arg0: i32, %arg1: i32) -> (i32, i32, i32, i32) {
    %c0_i32 = arith.constant 0 : i32
    %c0_i32_0 = arith.constant 0 : i32
    %c0_i32_1 = arith.constant 0 : i32
    return %arg0, %c0_i32, %arg1, %c0_i32_0 : i32, i32, i32, i32
  }
  func.func @transform_1(%arg0: i32, %arg1: i32) -> (i32, i32, i32) {
    %c0_i32 = arith.constant 0 : i32
    %c0_i32_0 = arith.constant 0 : i32
    return %arg0, %arg1, %c0_i32 : i32, i32, i32
  }
  func.func @transform_2(%arg0: i32, %arg1: i32) -> (i32, i32, i32) {
    %c0_i32 = arith.constant 0 : i32
    %c0_i32_0 = arith.constant 0 : i32
    %c0_i32_1 = arith.constant 0 : i32
    return %arg0, %c0_i32, %c0_i32_0 : i32, i32, i32
  }
  func.func @transform_3(%arg0: i32, %arg1: i32) -> (i32, i32, i32) {
    %c0_i32 = arith.constant 0 : i32
    %c0_i32_0 = arith.constant 0 : i32
    %c0_i32_1 = arith.constant 0 : i32
    return %arg0, %c0_i32, %c0_i32_0 : i32, i32, i32
  }
  func.func @transform_4(%arg0: i32, %arg1: i32) -> (i32, i32, i32) {
    %c0_i32 = arith.constant 0 : i32
    %c0_i32_0 = arith.constant 0 : i32
    %c0_i32_1 = arith.constant 0 : i32
    return %arg0, %c0_i32, %c0_i32_0 : i32, i32, i32
  }
}

</mosaic_0001>

<llo_original>
// kernel: tpu_custom_call.1
$region0: #{tpu_custom_call.1}
  #allocation0 [shape = 'u32[]', space=smem, size = 0x4, offset = 0x4, fixed_abs, tag = 'smem constant byte address 0x4 - core index']
  #allocation1 [shape = 'u32[72,128]{1,0:T(1,128)}', space=vmem, size = 0x9000, scoped, tag = 'internal scratch']
  #allocation2 [shape = 'f32[3,1,128]{2,1,0:T(1,128)}', space=vmem, size = 0x600, scoped, tag = 'scratch operand']
  #allocation3 [shape = 'f32[3,1,128]{2,1,0:T(1,128)}', space=vmem, size = 0x600, scoped, tag = 'scratch operand']
  #allocation4 [shape = 'f32[3,1,128]{2,1,0:T(1,128)}', space=vmem, size = 0x600, scoped, tag = 'scratch operand']
  %s0 = inlined_call_operand.hbm [shape: f32[2,4,2,128], index: 0, kind: input, shape index: {}]
  %s1 = inlined_call_operand.hbm [shape: s32[2,2,128], index: 1, kind: input, shape index: {}]
  %s2 = inlined_call_operand.vmem [shape: f32[1,3,1], index: 2, kind: output, shape index: {0}]
  %s3 = inlined_call_operand.vmem [shape: f32[1,3,1], index: 3, kind: output, shape index: {1}]
  %s4 = inlined_call_operand.vmem [shape: f32[1,3,1], index: 4, kind: output, shape index: {2}]
  %5 = xla_tuple %s2, %s3, %s4
  %s6 = sld [smem:[#allocation0]]
  $region50: #{tpu_custom_call.1} parent=0
    _
  %s8 = ssub.s32 1, %s6
  %s9 = scalar_select 0, %s8, %s6
  $region1: #{tpu_custom_call.1} parent=0
    #allocation5 [shape = 'u8[8192]{0}', space=vmem, size = 0x2000, scoped, tag = 'input window, operand 0, single buffered']
    #allocation6 [shape = 's32[1]{0}', space=sflag, size = 0x4, scoped, tag = 'scoped memory for tpu_custom_call.1']
    #allocation7 [shape = 'u8[2048]{0}', space=vmem, size = 0x800, scoped, tag = 'input window, operand 1, single buffered']
    #allocation8 [shape = 's32[1]{0}', space=sflag, size = 0x4, scoped, tag = 'scoped memory for tpu_custom_call.1']
    %10 = vsyncpa [#allocation6], 0
    %11 = vsyncpa [#allocation8], 0
    // Predicated region
    $region2: #{tpu_custom_call.1} parent=1 // pred_check
      _
    $region3: #{tpu_custom_call.1} parent=1 // pred_check_branch
      %13 = sbr.rel (0) target = $region5
    $region4: #{tpu_custom_call.1} parent=1 // pred_region
      %15 = vsyncadd [#allocation6], 0
      %s16 = sshll.u32 %s0, 4
      %s17 = int_to_ptr.hbm [resolvable:$true] %s16
      %s18 = sshll.u32 [#allocation5], 4
      %s19 = int_to_ptr.vmem [resolvable:$true] %s18
      %24 = dma.hbm_to_vmem [thread:$0]  %s17, 256, %s19, [#allocation6], 32, 32, 2
    $region5: #{tpu_custom_call.1} parent=1 // pred_fallthru
      _
    // Predicated region
    $region6: #{tpu_custom_call.1} parent=1 // pred_check
      _
    $region7: #{tpu_custom_call.1} parent=1 // pred_check_branch
      %26 = sbr.rel (0) target = $region9
    $region8: #{tpu_custom_call.1} parent=1 // pred_region
      %28 = vsyncadd [#allocation8], 0
      %s29 = sshll.u32 %s1, 4
      %s30 = int_to_ptr.hbm [resolvable:$true] %s29
      %s31 = sshll.u32 [#allocation7], 4
      %s32 = int_to_ptr.vmem [resolvable:$true] %s31
      %37 = dma.hbm_to_vmem [thread:$0]  %s30, 64, %s32, [#allocation8], 32, 32, 2
    $region9: #{tpu_custom_call.1} parent=1 // pred_fallthru
      _
    // Predicated region
    $region10: #{tpu_custom_call.1} parent=1 // pred_check
      _
    $region11: #{tpu_custom_call.1} parent=1 // pred_check_branch
      %39 = sbr.rel (0) target = $region13
    $region12: #{tpu_custom_call.1} parent=1 // pred_region
      %41 = dma.done [#allocation6], 256
    $region13: #{tpu_custom_call.1} parent=1 // pred_fallthru
      _
    // Predicated region
    $region14: #{tpu_custom_call.1} parent=1 // pred_check
      _
    $region15: #{tpu_custom_call.1} parent=1 // pred_check_branch
      %43 = sbr.rel (0) target = $region17
    $region16: #{tpu_custom_call.1} parent=1 // pred_region
      %45 = dma.done [#allocation8], 64
    $region17: #{tpu_custom_call.1} parent=1 // pred_fallthru
      _
    %p46 = scmp.eq.s32.totalorder 0, 0
    // Predicated region
    $region18: #{tpu_custom_call.1} parent=1 // pred_check
      %p47 = pneg %p46
    $region19: #{tpu_custom_call.1} parent=1 // pred_check_branch
      %49 = sbr.rel (%p47) target = $region21
    $region20: #{tpu_custom_call.1} parent=1 // pred_region
      %50 = vst [vmem:[#allocation2] sm:$0x1] 0.0
      %51 = vst [vmem:[#allocation2 + $0x1] sm:$0x1] 0.0
      %52 = vst [vmem:[#allocation2 + $0x2] sm:$0x1] 0.0
      %53 = vst [vmem:[#allocation3] sm:$0x1] 0.0
      %54 = vst [vmem:[#allocation3 + $0x1] sm:$0x1] 0.0
      %55 = vst [vmem:[#allocation3 + $0x2] sm:$0x1] 0.0
      %56 = vst [vmem:[#allocation4] sm:$0x1] 0.0
      %57 = vst [vmem:[#allocation4 + $0x1] sm:$0x1] 0.0
      %58 = vst [vmem:[#allocation4 + $0x2] sm:$0x1] 0.0
    $region21: #{tpu_custom_call.1} parent=1 // pred_fallthru
      _
    %s59 = scalar_lea.vmem [#allocation5], 2
    %v60 = vld [vmem:[%s59] sm:$0x3]
    %v61 = vld [vmem:[%s59 + $0x2] sm:$0x3]
    %v62 = vld [vmem:[%s59 + $0x4] sm:$0x3]
    %v63 = vld [vmem:[%s59 + $0x8] sm:$0x3]
    %v64 = vld [vmem:[%s59 + $0xa] sm:$0x3]
    %v65 = vld [vmem:[%s59 + $0xc] sm:$0x3]
    %v66 = vld [vmem:[#allocation7] sm:$0x3]
    %v67 = vld [vmem:[#allocation7 + $0x2] sm:$0x3]
    %vm68 = vcmp.eq.s32.totalorder %v66, 1
    %vm69 = vcmp.eq.s32.totalorder %v66, 2
    %vm70 = vcmp.eq.s32.totalorder %v66, 3
    %vm71 = vcmp.eq.s32.totalorder %v67, 1
    %vm72 = vcmp.eq.s32.totalorder %v67, 2
    %vm73 = vcmp.eq.s32.totalorder %v67, 3
    %v74 = vmul.f32 %v60, 1.442695
    %v75 = vpow.pop %v74
    %v76 = vmul.f32 %v61, 1.442695
    %v77 = vpow.pop %v76
    %v78 = vmul.f32 %v62, 1.442695
    %v79 = vpow.pop %v78
    %v80 = vmul.f32 %v63, 1.442695
    %v81 = vpow.pop %v80
    %v82 = vmul.f32 %v64, 1.442695
    %v83 = vpow.pop %v82
    %v84 = vmul.f32 %v65, 1.442695
    %v85 = vpow.pop %v84
    %v86 = vld [vmem:[#allocation2] sm:$0x1]
    %v87 = vld [vmem:[#allocation2 + $0x1] sm:$0x1]
    %v88 = vld [vmem:[#allocation2 + $0x2] sm:$0x1]
    %v89 = vsel %vm68, %v75, 0.0
    %v90 = vsel %vm69, %v77, 0.0
    %v91 = vsel %vm70, %v79, 0.0
    %v92 = vsel %vm71, %v81, 0.0
    %v93 = vsel %vm72, %v83, 0.0
    %v94 = vsel %vm73, %v85, 0.0
    %vm95 = vcmask 1041408
    %v96 = vsel %vm95, %v89, 0.0
    %v97 = vsel %vm95, %v92, 0.0
    %v98 = vadd.f32 %v96, %v97
    %v99 = vsel %vm95, %v90, 0.0
    %v100 = vsel %vm95, %v93, 0.0
    %v101 = vadd.f32 %v99, %v100
    %v102 = vsel %vm95, %v91, 0.0
    %v103 = vsel %vm95, %v94, 0.0
    %v104 = vadd.f32 %v102, %v103
    %v105 = vsel %vm95, %v98, 0.0
    %v106 = vrot.slane %v105, 4
    %v107 = vadd.f32 %v105, %v106
    %v108 = vrot.slane %v107, 2
    %v109 = vadd.f32 %v107, %v108
    %v110 = vrot.slane %v109, 1
    %v111 = vadd.f32 %v109, %v110
    %v112 = vsel %vm95, %v101, 0.0
    %v113 = vrot.slane %v112, 4
    %v114 = vadd.f32 %v112, %v113
    %v115 = vrot.slane %v114, 2
    %v116 = vadd.f32 %v114, %v115
    %v117 = vrot.slane %v116, 1
    %v118 = vadd.f32 %v116, %v117
    %v119 = vsel %vm95, %v104, 0.0
    %v120 = vrot.slane %v119, 4
    %v121 = vadd.f32 %v119, %v120
    %v122 = vrot.slane %v121, 2
    %v123 = vadd.f32 %v121, %v122
    %v124 = vrot.slane %v123, 1
    %v125 = vadd.f32 %v123, %v124
    %v126 = vadd.f32 %v86, %v111
    %v127 = vadd.f32 %v87, %v118
    %v128 = vadd.f32 %v88, %v125
    %129 = vst [vmem:[#allocation2] sm:$0x1] %v126
    %130 = vst [vmem:[#allocation2 + $0x1] sm:$0x1] %v127
    %131 = vst [vmem:[#allocation2 + $0x2] sm:$0x1] %v128
    %v132 = vld [vmem:[#allocation3] sm:$0x1]
    %v133 = vld [vmem:[#allocation3 + $0x1] sm:$0x1]
    %v134 = vld [vmem:[#allocation3 + $0x2] sm:$0x1]
    %v135 = vsel %vm95, %v75, 0.0
    %v136 = vsel %vm95, %v81, 0.0
    %v137 = vadd.f32 %v135, %v136
    %v138 = vsel %vm95, %v77, 0.0
    %v139 = vsel %vm95, %v83, 0.0
    %v140 = vadd.f32 %v138, %v139
    %v141 = vsel %vm95, %v79, 0.0
    %v142 = vsel %vm95, %v85, 0.0
    %v143 = vadd.f32 %v141, %v142
    %v144 = vsel %vm95, %v137, 0.0
    %v145 = vrot.slane %v144, 4
    %v146 = vadd.f32 %v144, %v145
    %v147 = vrot.slane %v146, 2
    %v148 = vadd.f32 %v146, %v147
    %v149 = vrot.slane %v148, 1
    %v150 = vadd.f32 %v148, %v149
    %v151 = vsel %vm95, %v140, 0.0
    %v152 = vrot.slane %v151, 4
    %v153 = vadd.f32 %v151, %v152
    %v154 = vrot.slane %v153, 2
    %v155 = vadd.f32 %v153, %v154
    %v156 = vrot.slane %v155, 1
    %v157 = vadd.f32 %v155, %v156
    %v158 = vsel %vm95, %v143, 0.0
    %v159 = vrot.slane %v158, 4
    %v160 = vadd.f32 %v158, %v159
    %v161 = vrot.slane %v160, 2
    %v162 = vadd.f32 %v160, %v161
    %v163 = vrot.slane %v162, 1
    %v164 = vadd.f32 %v162, %v163
    %v165 = vadd.f32 %v132, %v150
    %v166 = vadd.f32 %v133, %v157
    %v167 = vadd.f32 %v134, %v164
    %168 = vst [vmem:[#allocation3] sm:$0x1] %v165
    %169 = vst [vmem:[#allocation3 + $0x1] sm:$0x1] %v166
    %170 = vst [vmem:[#allocation3 + $0x2] sm:$0x1] %v167
    %v171 = vld [vmem:[#allocation4] sm:$0x1]
    %v172 = vld [vmem:[#allocation4 + $0x1] sm:$0x1]
    %v173 = vld [vmem:[#allocation4 + $0x2] sm:$0x1]
    %v174 = vsel %vm68, 1.0, 0.0
    %v175 = vsel %vm69, 1.0, 0.0
    %v176 = vsel %vm70, 1.0, 0.0
    %v177 = vsel %vm71, 1.0, 0.0
    %v178 = vsel %vm72, 1.0, 0.0
    %v179 = vsel %vm73, 1.0, 0.0
    %v180 = vsel %vm95, %v174, 0.0
    %v181 = vsel %vm95, %v177, 0.0
    %v182 = vadd.f32 %v180, %v181
    %v183 = vsel %vm95, %v175, 0.0
    %v184 = vsel %vm95, %v178, 0.0
    %v185 = vadd.f32 %v183, %v184
    %v186 = vsel %vm95, %v176, 0.0
    %v187 = vsel %vm95, %v179, 0.0
    %v188 = vadd.f32 %v186, %v187
    %v189 = vsel %vm95, %v182, 0.0
    %v190 = vrot.slane %v189, 4
    %v191 = vadd.f32 %v189, %v190
    %v192 = vrot.slane %v191, 2
    %v193 = vadd.f32 %v191, %v192
    %v194 = vrot.slane %v193, 1
    %v195 = vadd.f32 %v193, %v194
    %v196 = vsel %vm95, %v185, 0.0
    %v197 = vrot.slane %v196, 4
    %v198 = vadd.f32 %v196, %v197
    %v199 = vrot.slane %v198, 2
    %v200 = vadd.f32 %v198, %v199
    %v201 = vrot.slane %v200, 1
    %v202 = vadd.f32 %v200, %v201
    %v203 = vsel %vm95, %v188, 0.0
    %v204 = vrot.slane %v203, 4
    %v205 = vadd.f32 %v203, %v204
    %v206 = vrot.slane %v205, 2
    %v207 = vadd.f32 %v205, %v206
    %v208 = vrot.slane %v207, 1
    %v209 = vadd.f32 %v207, %v208
    %v210 = vadd.f32 %v171, %v195
    %v211 = vadd.f32 %v172, %v202
    %v212 = vadd.f32 %v173, %v209
    %213 = vst [vmem:[#allocation4] sm:$0x1] %v210
    %214 = vst [vmem:[#allocation4 + $0x1] sm:$0x1] %v211
    %215 = vst [vmem:[#allocation4 + $0x2] sm:$0x1] %v212
    // Predicated region
    $region22: #{tpu_custom_call.1} parent=1 // pred_check
      %p216 = pneg %p46
    $region23: #{tpu_custom_call.1} parent=1 // pred_check_branch
      %218 = sbr.rel (%p216) target = $region25
    $region24: #{tpu_custom_call.1} parent=1 // pred_region
      %v219 = vld [vmem:[#allocation2] sm:$0x1]
      %v220 = vld [vmem:[#allocation2 + $0x1] sm:$0x1]
      %v221 = vld [vmem:[#allocation2 + $0x2] sm:$0x1]
      %v222 = vadd.f32 %v219, 0.0
      %v223 = vadd.f32 %v220, 0.0
      %v224 = vadd.f32 %v221, 0.0
      %228 = vst [vmem:[#allocation1] ss:$9 sm:$0xff] %v222
      %s229 = scalar_lea.vmem [#allocation1], 1
      %230 = vst [vmem:[%s229] ss:$9 sm:$0xff] %v223
      %s231 = scalar_lea.vmem [#allocation1], 2
      %232 = vst [vmem:[%s231] ss:$9 sm:$0xff] %v224
      %v233 = vld [vmem:[#allocation1] sm:$0xff]
      %vm235 = vcmask 1042432
      %v236 = vsel %vm235, %v233, 0.0
      %237 = vadd.xlane.f32.xlu0 %v236
      %v238 = vpop.xlane.xlu0 %237
      %vm239 = vcmask 2048
      %240 = vst.msk [vmem:[%s2] sm:$0x7] %vm239, %v238
      %v241 = vld [vmem:[#allocation3] sm:$0x1]
      %v242 = vld [vmem:[#allocation3 + $0x1] sm:$0x1]
      %v243 = vld [vmem:[#allocation3 + $0x2] sm:$0x1]
      %v244 = vadd.f32 %v241, 0.0
      %v245 = vadd.f32 %v242, 0.0
      %v246 = vadd.f32 %v243, 0.0
      %250 = vst [vmem:[#allocation1] ss:$9 sm:$0xff] %v244
      %s251 = scalar_lea.vmem [#allocation1], 1
      %252 = vst [vmem:[%s251] ss:$9 sm:$0xff] %v245
      %s253 = scalar_lea.vmem [#allocation1], 2
      %254 = vst [vmem:[%s253] ss:$9 sm:$0xff] %v246
      %v255 = vld [vmem:[#allocation1] sm:$0xff]
      %v257 = vsel %vm235, %v255, 0.0
      %258 = vadd.xlane.f32.xlu0 %v257
      %v259 = vpop.xlane.xlu0 %258
      %260 = vst.msk [vmem:[%s3] sm:$0x7] %vm239, %v259
      %v261 = vld [vmem:[#allocation4] sm:$0x1]
      %v262 = vld [vmem:[#allocation4 + $0x1] sm:$0x1]
      %v263 = vld [vmem:[#allocation4 + $0x2] sm:$0x1]
      %v264 = vadd.f32 %v261, 0.0
      %v265 = vadd.f32 %v262, 0.0
      %v266 = vadd.f32 %v263, 0.0
      %270 = vst [vmem:[#allocation1] ss:$9 sm:$0xff] %v264
      %s271 = scalar_lea.vmem [#allocation1], 1
      %272 = vst [vmem:[%s271] ss:$9 sm:$0xff] %v265
      %s273 = scalar_lea.vmem [#allocation1], 2
      %274 = vst [vmem:[%s273] ss:$9 sm:$0xff] %v266
      %v275 = vld [vmem:[#allocation1] sm:$0xff]
      %v277 = vsel %vm235, %v275, 0.0
      %278 = vadd.xlane.f32.xlu0 %v277
      %v279 = vpop.xlane.xlu0 %278
      %280 = vst.msk [vmem:[%s4] sm:$0x7] %vm239, %v279
    $region25: #{tpu_custom_call.1} parent=1 // pred_fallthru
      _
    // Predicated region
    $region26: #{tpu_custom_call.1} parent=1 // pred_check
      _
    $region27: #{tpu_custom_call.1} parent=1 // pred_check_branch
      %282 = sbr.rel (0) target = $region29
    $region28: #{tpu_custom_call.1} parent=1 // pred_region
      _
    $region29: #{tpu_custom_call.1} parent=1 // pred_fallthru
      _
    // Predicated region
    $region30: #{tpu_custom_call.1} parent=1 // pred_check
      _
    $region31: #{tpu_custom_call.1} parent=1 // pred_check_branch
      %284 = sbr.rel (0) target = $region33
    $region32: #{tpu_custom_call.1} parent=1 // pred_region
      _
    $region33: #{tpu_custom_call.1} parent=1 // pred_fallthru
      _
    // Predicated region
    $region34: #{tpu_custom_call.1} parent=1 // pred_check
      _
    $region35: #{tpu_custom_call.1} parent=1 // pred_check_branch
      %286 = sbr.rel (0) target = $region37
    $region36: #{tpu_custom_call.1} parent=1 // pred_region
      _
    $region37: #{tpu_custom_call.1} parent=1 // pred_fallthru
      _
    // Predicated region
    $region38: #{tpu_custom_call.1} parent=1 // pred_check
      _
    $region39: #{tpu_custom_call.1} parent=1 // pred_check_branch
      %288 = sbr.rel (0) target = $region41
    $region40: #{tpu_custom_call.1} parent=1 // pred_region
      _
    $region41: #{tpu_custom_call.1} parent=1 // pred_fallthru
      _
    // Predicated region
    $region42: #{tpu_custom_call.1} parent=1 // pred_check
      _
    $region43: #{tpu_custom_call.1} parent=1 // pred_check_branch
      %290 = sbr.rel (0) target = $region45
    $region44: #{tpu_custom_call.1} parent=1 // pred_region
      _
    $region45: #{tpu_custom_call.1} parent=1 // pred_fallthru
      _
    // Predicated region
    $region46: #{tpu_custom_call.1} parent=1 // pred_check
      _
    $region47: #{tpu_custom_call.1} parent=1 // pred_check_branch
      %292 = sbr.rel (0) target = $region49
    $region48: #{tpu_custom_call.1} parent=1 // pred_region
      _
    $region49: #{tpu_custom_call.1} parent=1 // pred_fallthru
      _
    %293 = vsyncpa [#allocation6], 1
    %294 = vsyncpa [#allocation8], 1

</llo_original>
